<compile_context>
chip_gen: v6e
topology: v6e:2x2x1
jax: 0.10.0
libtpu: 0.0.40
codegen_flags: <defaults>
</compile_context>

<pallas_src>
import jax
import jax.numpy as jnp
from jax import lax
from jax.experimental import pallas as pl
from jax.experimental.pallas import tpu as pltpu


# ----------------------------- fused kernel ----------------------------------

def _row_halo_concat_bf16(a):
    """(H, L) f32 -> (H, 3L) bf16, lanes = [row i-1 | row i | row i+1], zero edges.

    Builds the kernel-row (dy) halo at value level (sublane shifts), replacing
    the old VMEM scratch + store->reload of misaligned windows.  The three dy
    contributions then collapse into ONE matmul against the dy-stacked band
    matrix (K = 3*L instead of three K = L matmuls).  Shifts are done on
    unpacked f32 vregs; the result is rounded to bf16 only at the MXU input.
    """
    H, L = a.shape
    z = jnp.zeros((1, L), a.dtype)
    up = jnp.concatenate([z, a[:-1]], axis=0)    # row i-1   (kernel row dy = 0)
    dn = jnp.concatenate([a[1:], z], axis=0)     # row i+1   (kernel row dy = 2)
    return jnp.concatenate([up, a, dn], axis=1).astype(jnp.bfloat16)


def _depth_conv_kernel(x_ref, dwbias_ref, shift_ref, dwband_ref, pwband_ref,
                       out_ref):
    """Fused depthwise 3x3 conv + bias -> 3x3 conv -> BN(eval) -> ReLU.

    One grid step processes G images folded onto the lane axis (L1 = G*W*C,
    L2 = G*W*Co), so every operand is >= 128 lanes wide.

      x_ref:      (1, H, L1)   bf16  lane-dense input slab
      dwbias_ref: (1, L1)      f32   depthwise bias, tiled per lane
      shift_ref:  (1, L2)      f32   folded conv-bias + BN shift, per lane
      dwband_ref: (3*L1, L1)   bf16  depthwise conv as dy-stacked band matrix
      pwband_ref: (3*L1, L2)   bf16  dense conv (BN scale folded), band matrix
      out_ref:    (1, H, L2)   f32   lane-dense output slab
    """
    x = x_ref[0].astype(jnp.float32)                       # (H, L1)

    # Stage 1: depthwise conv == ONE MXU matmul (bf16 in, f32 accumulate) + bias.
    y = jnp.dot(_row_halo_concat_bf16(x), dwband_ref[...],
                preferred_element_type=jnp.float32)
    y = y + dwbias_ref[...]                                # f32 (H, L1)

    # Stage 2: dense conv (BN scale pre-folded into the weights) == ONE matmul;
    # f32 epilogue: add folded shift + ReLU, full-lane-width unmasked store.
    z = jnp.dot(_row_halo_concat_bf16(y), pwband_ref[...],
                preferred_element_type=jnp.float32)
    out_ref[0] = jnp.maximum(z + shift_ref[...], 0.0)


# ----------------------------- weight preprocessing --------------------------

def _band_matrices(w_dw, w_pw_scaled, W, G):
    """Fold the 3 dx taps + width zero-padding of both 3x3 convs into band
    matrices, stacked over kernel row dy (the matmul K axis) and block-diagonal
    over the G images folded onto the lane axis.

      dwband[(dy,g,win,cin),(g',wout,cout)] = w_dw[dy,win-wout+1,cout]*(cin==cout)*(g==g')
      pwband[(dy,g,win,cin),(g',wout,cout)] = w_pw_scaled[dy,win-wout+1,cin,cout]*(g==g')
      (zero whenever |win - wout| > 1 -- this realizes the width padding).

    TODO(synk): band bytes = 3*(G*W*C)*(G*W*Co)*2 grow quadratically in W and are
    mostly zeros; for large H/W/C switch to an H-tile/Co-tile grid (or per-dx
    roll + dense (C,Co) matmuls) well before the v7x 64 MiB physical / 32 MiB
    default scoped VMEM ceiling.  Current shapes use < 0.5 MiB.
    """
    f32 = jnp.float32
    C = w_dw.shape[-1]
    Co = w_pw_scaled.shape[-1]

    win = jnp.arange(W)[:, None]
    wout = jnp.arange(W)[None, :]
    dx = win - wout + 1                                    # kernel column index
    valid = ((dx >= 0) & (dx <= 2)).astype(f32)            # zero == width padding
    dxc = jnp.clip(dx, 0, 2)

    eye_c = jnp.eye(C, dtype=f32)
    eye_g = jnp.eye(G, dtype=f32)

    # Depthwise taps: (dy, win, wout, cout) -> (dy, win, cin, wout, cout).
    t = w_dw[:, dxc, :] * valid[None, :, :, None]
    dband = t[:, :, None, :, :] * eye_c[None, None, :, None, :]        # (3,W,C,W,C)
    # Dense taps: (dy, win, wout, cin, cout) -> (dy, win, cin, wout, cout).
    t2 = w_pw_scaled[:, dxc, :, :] * valid[None, :, :, None, None]
    pband = jnp.transpose(t2, (0, 1, 3, 2, 4))                         # (3,W,C,W,Co)

    def blockdiag_and_stack(b, cdim):
        b = (b[:, None, :, :, None, :, :]
             * eye_g[None, :, None, None, :, None, None])   # (3,G,W,C,G,W,cdim)
        return b.reshape(3 * G * W * C, G * W * cdim).astype(jnp.bfloat16)

    return blockdiag_and_stack(dband, C), blockdiag_and_stack(pband, Co)


def _pick_images_per_block(N, W, C):
    """Fold images onto the lane axis (in pairs) until the stage-1 operand is
    >= 128 lanes wide (full vreg / full MXU width).  On v7x with a tiny batch
    (e.g. N == 2) you may prefer images_per_block=1 so grid == (N,) keeps both
    TensorCores busy; on v5e/v6e (1 TC) the fold is a pure win.
    """
    g = 1
    while W * C * g < 128 and N % (2 * g) == 0:
        g *= 2
    return g


# ----------------------------- wrapper / factory ------------------------------

def make_depth_conv(params, *, batch, height, width, images_per_block=None):
    """Precompute the band matrices / folded affine terms ONCE (they depend only
    on the parameters) and return a jitted forward: (N,C,H,W) f32 -> (N,Co,H,W) f32.
    """
    N, H, W = batch, height, width
    w_dw = jnp.asarray(params["w_dw"], jnp.float32)       # (3, 3, C)
    b_dw = jnp.asarray(params["b_dw"], jnp.float32)       # (C,)
    w_pw = jnp.asarray(params["w_conv"], jnp.float32)     # (3, 3, C, Co) HWIO
    b_pw = jnp.asarray(params["b_conv"], jnp.float32)     # (Co,)
    gamma = jnp.asarray(params["bn_gamma"], jnp.float32)
    beta = jnp.asarray(params["bn_beta"], jnp.float32)
    mean = jnp.asarray(params["bn_mean"], jnp.float32)
    var = jnp.asarray(params["bn_var"], jnp.float32)
    eps = params["bn_eps"]
    C, Co = w_dw.shape[-1], w_pw.shape[-1]

    G = images_per_block or _pick_images_per_block(N, W, C)
    assert N % G == 0, (N, G)
    NG = N // G
    L1, L2 = G * W * C, G * W * Co

    # Fold BN scale into the dense-conv weights; fold conv bias + BN mean/beta
    # into one per-lane additive term so the kernel epilogue is just add + ReLU.
    scale = gamma / jnp.sqrt(var + eps)
    shift = scale * (b_pw - mean) + beta
    dwband, pwband = _band_matrices(w_dw, w_pw * scale, W, G)          # bf16
    dwbias = jnp.tile(b_dw, G * W).reshape(1, L1)                      # f32
    shift_l = jnp.tile(shift, G * W).reshape(1, L2)                    # f32

    pallas_fn = pl.pallas_call(
        _depth_conv_kernel,
        out_shape=jax.ShapeDtypeStruct((NG, H, L2), jnp.float32),
        grid=(NG,),
        in_specs=[
            pl.BlockSpec((1, H, L1), lambda n: (n, 0, 0)),     # input slab
            pl.BlockSpec((1, L1), lambda n: (0, 0)),           # dw bias (resident)
            pl.BlockSpec((1, L2), lambda n: (0, 0)),           # folded BN shift
            pl.BlockSpec((3 * L1, L1), lambda n: (0, 0)),      # dw band weights
            pl.BlockSpec((3 * L1, L2), lambda n: (0, 0)),      # dense band weights
        ],
        out_specs=pl.BlockSpec((1, H, L2), lambda n: (n, 0, 0)),
        compiler_params=pltpu.CompilerParams(
            dimension_semantics=("parallel",)),
    )

    @jax.jit
    def forward(x_nchw):
        assert x_nchw.shape == (N, C, H, W), x_nchw.shape
        # NCHW -> lane-dense (NG, H, G*W*C) slab, bf16 for DMA/MXU.
        x = jnp.transpose(x_nchw, (0, 2, 3, 1)).astype(jnp.bfloat16)     # NHWC
        x = (x.reshape(NG, G, H, W, C).transpose(0, 2, 1, 3, 4)
              .reshape(NG, H, L1))
        out2d = pallas_fn(x, dwbias, shift_l, dwband, pwband)            # (NG,H,L2)
        out = (out2d.reshape(NG, H, G, W, Co).transpose(0, 2, 1, 3, 4)
                    .reshape(N, H, W, Co))
        return jnp.transpose(out, (0, 3, 1, 2))                          # NCHW

    return forward


# ----------------------------- pure-JAX reference ----------------------------

def depth_conv_reference(x_nchw, params):
    C = x_nchw.shape[1]
    # depthwise conv: PyTorch weight layout (C*kpl, 1, 3, 3)
    w_dw_oihw = jnp.transpose(params["w_dw"], (2, 0, 1))[:, None, :, :]
    y = lax.conv_general_dilated(
        x_nchw, w_dw_oihw, window_strides=(1, 1), padding=((1, 1), (1, 1)),
        dimension_numbers=("NCHW", "OIHW", "NCHW"), feature_group_count=C,
        precision=lax.Precision.HIGHEST)
    y = y + params["b_dw"][None, :, None, None]
    # dense 3x3 conv
    w_pw_oihw = jnp.transpose(params["w_conv"], (3, 2, 0, 1))
    z = lax.conv_general_dilated(
        y, w_pw_oihw, window_strides=(1, 1), padding=((1, 1), (1, 1)),
        dimension_numbers=("NCHW", "OIHW", "NCHW"),
        precision=lax.Precision.HIGHEST)
    z = z + params["b_conv"][None, :, None, None]
    # BatchNorm (eval) + ReLU
    g, b = params["bn_gamma"], params["bn_beta"]
    m, v = params["bn_mean"], params["bn_var"]
    z = (z - m[None, :, None, None]) / jnp.sqrt(v[None, :, None, None] + params["bn_eps"])
    z = z * g[None, :, None, None] + b[None, :, None, None]
    return jnp.maximum(z, 0.0)


# ----------------------------- main ------------------------------------------

if __name__ == "__main__":
    N, Cin, Cout, H, W = 2, 4, 8, 16, 16   # kernel_per_layer = 1

    key = jax.random.PRNGKey(0)
    ks = jax.random.split(key, 9)
    params = {
        "w_dw":   0.2 * jax.random.normal(ks[0], (3, 3, Cin), jnp.float32),
        "b_dw":   0.1 * jax.random.normal(ks[1], (Cin,), jnp.float32),
        "w_conv": 0.2 * jax.random.normal(ks[2], (3, 3, Cin, Cout), jnp.float32),
        "b_conv": 0.1 * jax.random.normal(ks[3], (Cout,), jnp.float32),
        "bn_gamma": 1.0 + 0.1 * jax.random.normal(ks[4], (Cout,), jnp.float32),
        "bn_beta":  0.1 * jax.random.normal(ks[5], (Cout,), jnp.float32),
        "bn_mean":  0.1 * jax.random.normal(ks[6], (Cout,), jnp.float32),
        "bn_var":   1.0 + 0.1 * jax.random.uniform(ks[7], (Cout,), jnp.float32),
        "bn_eps":   1e-5,
    }
    x = jax.random.normal(ks[8], (N, Cin, H, W), jnp.float32)

    depth_conv = make_depth_conv(params, batch=N, height=H, width=W)
    out = jax.block_until_ready(depth_conv(x))
    ref = jax.block_until_ready(depth_conv_reference(x, params))

    assert out.shape == (N, Cout, H, W), out.shape
    # bf16 MXU inputs (f32 accumulation) vs. the f32 HIGHEST-precision reference:
    # tolerance relaxed as recommended by the review.
    err = jnp.max(jnp.abs(out - ref))
    assert jnp.allclose(out, ref, rtol=5e-2, atol=5e-2), f"max abs err = {err}"
    print("KERNEL_OK")
</pallas_src>

<mosaic_0001>
module attributes {stable_mosaic.version = 11 : i64} {
  func.func @_depth_conv_kernel(%arg0: i32, %arg1: memref<1x16x128xbf16, #tpu.memory_space<vmem>>, %arg2: memref<1x128xf32, #tpu.memory_space<vmem>>, %arg3: memref<1x256xf32, #tpu.memory_space<vmem>>, %arg4: memref<384x128xbf16, #tpu.memory_space<vmem>>, %arg5: memref<384x256xbf16, #tpu.memory_space<vmem>>, %arg6: memref<1x16x256xf32, #tpu.memory_space<vmem>>) attributes {dimension_semantics = [#tpu.dimension_semantics<parallel>], iteration_bounds = array<i64: 1>, scalar_prefetch = 0 : i64, scratch_operands = 0 : i64, tpu.core_type = #tpu.core_type<tc>, window_params = [{transform_indices = @transform_0, window_bounds = array<i64: 1, 16, 128>}, {pipeline_mode = #tpu.pipeline_mode<synchronous>, transform_indices = @transform_1, window_bounds = array<i64: 1, 128>}, {pipeline_mode = #tpu.pipeline_mode<synchronous>, transform_indices = @transform_2, window_bounds = array<i64: 1, 256>}, {pipeline_mode = #tpu.pipeline_mode<synchronous>, transform_indices = @transform_3, window_bounds = array<i64: 384, 128>}, {pipeline_mode = #tpu.pipeline_mode<synchronous>, transform_indices = @transform_4, window_bounds = array<i64: 384, 256>}, {transform_indices = @transform_5, window_bounds = array<i64: 1, 16, 256>}]} {
    %c0 = arith.constant 0 : index
    %c0_0 = arith.constant 0 : index
    %c0_1 = arith.constant 0 : index
    %0 = vector.load %arg1[%c0, %c0_0, %c0_1] : memref<1x16x128xbf16, #tpu.memory_space<vmem>>, vector<1x16x128xbf16>
    %1 = vector.shape_cast %0 : vector<1x16x128xbf16> to vector<16x128xbf16>
    %2 = arith.extf %1 : vector<16x128xbf16> to vector<16x128xf32>
    %cst = arith.constant 0.000000e+00 : f32
    %3 = vector.broadcast %cst : f32 to vector<1x128xf32>
    %4 = vector.extract_strided_slice %2 {offsets = [0, 0], sizes = [15, 128], strides = [1, 1]} : vector<16x128xf32> to vector<15x128xf32>
    %5 = tpu.concatenate %3, %4 in 0 : vector<1x128xf32>, vector<15x128xf32> -> vector<16x128xf32>
    %6 = vector.extract_strided_slice %2 {offsets = [1, 0], sizes = [15, 128], strides = [1, 1]} : vector<16x128xf32> to vector<15x128xf32>
    %7 = tpu.concatenate %6, %3 in 0 : vector<15x128xf32>, vector<1x128xf32> -> vector<16x128xf32>
    %8 = tpu.concatenate %5, %2, %7 in 1 : vector<16x128xf32>, vector<16x128xf32>, vector<16x128xf32> -> vector<16x384xf32>
    %9 = arith.truncf %8 : vector<16x384xf32> to vector<16x384xbf16>
    %c0_2 = arith.constant 0 : index
    %c0_3 = arith.constant 0 : index
    %10 = vector.load %arg4[%c0_2, %c0_3] : memref<384x128xbf16, #tpu.memory_space<vmem>>, vector<384x128xbf16>
    %cst_4 = arith.constant dense<0.000000e+00> : vector<16x128xf32>
    %11 = tpu.matmul %9, %10, %cst_4 {dimension_numbers = #tpu.dot_dimension_numbers<[1], [0], [0], [1], [0, 0, 1, 1], [], []>} : vector<16x384xbf16>, vector<384x128xbf16>, vector<16x128xf32> -> vector<16x128xf32>
    %c0_5 = arith.constant 0 : index
    %c0_6 = arith.constant 0 : index
    %12 = vector.load %arg2[%c0_5, %c0_6] : memref<1x128xf32, #tpu.memory_space<vmem>>, vector<1x128xf32>
    %13 = vector.broadcast %12 : vector<1x128xf32> to vector<16x128xf32>
    %14 = arith.addf %11, %13 : vector<16x128xf32>
    %cst_7 = arith.constant 0.000000e+00 : f32
    %15 = vector.broadcast %cst_7 : f32 to vector<1x128xf32>
    %16 = vector.extract_strided_slice %14 {offsets = [0, 0], sizes = [15, 128], strides = [1, 1]} : vector<16x128xf32> to vector<15x128xf32>
    %17 = tpu.concatenate %15, %16 in 0 : vector<1x128xf32>, vector<15x128xf32> -> vector<16x128xf32>
    %18 = vector.extract_strided_slice %14 {offsets = [1, 0], sizes = [15, 128], strides = [1, 1]} : vector<16x128xf32> to vector<15x128xf32>
    %19 = tpu.concatenate %18, %15 in 0 : vector<15x128xf32>, vector<1x128xf32> -> vector<16x128xf32>
    %20 = tpu.concatenate %17, %14, %19 in 1 : vector<16x128xf32>, vector<16x128xf32>, vector<16x128xf32> -> vector<16x384xf32>
    %21 = arith.truncf %20 : vector<16x384xf32> to vector<16x384xbf16>
    %c0_8 = arith.constant 0 : index
    %c0_9 = arith.constant 0 : index
    %22 = vector.load %arg5[%c0_8, %c0_9] : memref<384x256xbf16, #tpu.memory_space<vmem>>, vector<384x256xbf16>
    %cst_10 = arith.constant dense<0.000000e+00> : vector<16x256xf32>
    %23 = tpu.matmul %21, %22, %cst_10 {dimension_numbers = #tpu.dot_dimension_numbers<[1], [0], [0], [1], [0, 0, 1, 1], [], []>} : vector<16x384xbf16>, vector<384x256xbf16>, vector<16x256xf32> -> vector<16x256xf32>
    %c0_11 = arith.constant 0 : index
    %c0_12 = arith.constant 0 : index
    %24 = vector.load %arg3[%c0_11, %c0_12] : memref<1x256xf32, #tpu.memory_space<vmem>>, vector<1x256xf32>
    %25 = vector.broadcast %24 : vector<1x256xf32> to vector<16x256xf32>
    %26 = arith.addf %23, %25 : vector<16x256xf32>
    %cst_13 = arith.constant 0.000000e+00 : f32
    %27 = vector.broadcast %cst_13 : f32 to vector<16x256xf32>
    %28 = arith.maximumf %26, %27 : vector<16x256xf32>
    %c0_14 = arith.constant 0 : index
    %c0_15 = arith.constant 0 : index
    %c0_16 = arith.constant 0 : index
    %29 = vector.load %arg6[%c0_14, %c0_15, %c0_16] : memref<1x16x256xf32, #tpu.memory_space<vmem>>, vector<1x16x256xf32>
    %30 = vector.shape_cast %29 : vector<1x16x256xf32> to vector<16x256xf32>
    %31 = vector.shape_cast %28 : vector<16x256xf32> to vector<1x16x256xf32>
    tpu.vector_store %arg6[%c0_14, %c0_15, %c0_16], %31 {strides = array<i32>} : memref<1x16x256xf32, #tpu.memory_space<vmem>>, vector<1x16x256xf32>,
    return
  }
  func.func @transform_0(%arg0: i32) -> (i32, i32, i32) {
    %c0_i32 = arith.constant 0 : i32
    %c0_i32_0 = arith.constant 0 : i32
    %c0_i32_1 = arith.constant 0 : i32
    return %arg0, %c0_i32, %c0_i32_0 : i32, i32, i32
  }
  func.func @transform_1(%arg0: i32) -> (i32, i32) {
    %c0_i32 = arith.constant 0 : i32
    %c0_i32_0 = arith.constant 0 : i32
    %c0_i32_1 = arith.constant 0 : i32
    return %c0_i32, %c0_i32_0 : i32, i32
  }
  func.func @transform_2(%arg0: i32) -> (i32, i32) {
    %c0_i32 = arith.constant 0 : i32
    %c0_i32_0 = arith.constant 0 : i32
    %c0_i32_1 = arith.constant 0 : i32
    return %c0_i32, %c0_i32_0 : i32, i32
  }
  func.func @transform_3(%arg0: i32) -> (i32, i32) {
    %c0_i32 = arith.constant 0 : i32
    %c0_i32_0 = arith.constant 0 : i32
    %c0_i32_1 = arith.constant 0 : i32
    return %c0_i32, %c0_i32_0 : i32, i32
  }
  func.func @transform_4(%arg0: i32) -> (i32, i32) {
    %c0_i32 = arith.constant 0 : i32
    %c0_i32_0 = arith.constant 0 : i32
    %c0_i32_1 = arith.constant 0 : i32
    return %c0_i32, %c0_i32_0 : i32, i32
  }
  func.func @transform_5(%arg0: i32) -> (i32, i32, i32) {
    %c0_i32 = arith.constant 0 : i32
    %c0_i32_0 = arith.constant 0 : i32
    %c0_i32_1 = arith.constant 0 : i32
    return %arg0, %c0_i32, %c0_i32_0 : i32, i32, i32
  }
}

</mosaic_0001>

<llo_original>
// kernel: forward.1
$region0: #{forward.1}
  #allocation0 [shape = 'u32[]', space=smem, size = 0x4, offset = 0x4, fixed_abs, tag = 'smem constant byte address 0x4 - core index']
  #allocation1 [shape = 'u32[144,128]{1,0:T(1,128)}', space=vmem, size = 0x12000, scoped, tag = 'internal scratch']
  %s0 = inlined_call_operand.vmem [shape: bf16[1,16,128], index: 0, kind: input, shape index: {}]
  %s1 = inlined_call_operand.vmem [shape: f32[1,128], index: 1, kind: input, shape index: {}]
  %s2 = inlined_call_operand.vmem [shape: f32[1,256], index: 2, kind: input, shape index: {}]
  %s3 = inlined_call_operand.hbm [shape: bf16[384,128], index: 3, kind: input, shape index: {}]
  %s4 = inlined_call_operand.vmem [shape: bf16[384,256], index: 4, kind: input, shape index: {}]
  %s5 = inlined_call_operand.vmem [shape: f32[1,16,256], index: 5, kind: output, shape index: {}]
  %s6 = sld [smem:[#allocation0]]
  $region34: #{forward.1} parent=0
    _
  %s8 = ssub.s32 1, %s6
  %s9 = scalar_select 0, %s8, %s6
  $region1: #{forward.1} parent=0
    #allocation2 [shape = 'u8[98304]{0}', space=vmem, size = 0x18000, scoped, tag = 'input window, operand 3, single buffered']
    #allocation3 [shape = 's32[1]{0}', space=sflag, size = 0x4, scoped, tag = 'scoped memory for forward.1']
    %10 = vsyncpa [#allocation3], 0
    // Predicated region
    $region2: #{forward.1} parent=1 // pred_check
      _
    $region3: #{forward.1} parent=1 // pred_check_branch
      %12 = sbr.rel (0) target = $region5
    $region4: #{forward.1} parent=1 // pred_region
      _
    $region5: #{forward.1} parent=1 // pred_fallthru
      _
    // Predicated region
    $region6: #{forward.1} parent=1 // pred_check
      _
    $region7: #{forward.1} parent=1 // pred_check_branch
      %14 = sbr.rel (0) target = $region9
    $region8: #{forward.1} parent=1 // pred_region
      _
    $region9: #{forward.1} parent=1 // pred_fallthru
      _
    // Predicated region
    $region10: #{forward.1} parent=1 // pred_check
      _
    $region11: #{forward.1} parent=1 // pred_check_branch
      %16 = sbr.rel (0) target = $region13
    $region12: #{forward.1} parent=1 // pred_region
      _
    $region13: #{forward.1} parent=1 // pred_fallthru
      _
    // Predicated region
    $region14: #{forward.1} parent=1 // pred_check
      _
    $region15: #{forward.1} parent=1 // pred_check_branch
      %18 = sbr.rel (0) target = $region17
    $region16: #{forward.1} parent=1 // pred_region
      %s20 = ssub.s32 3072, 3072
      %21 = vsyncadd [#allocation3], %s20
      %s22 = sshll.u32 [#allocation2], 4
      %s23 = int_to_ptr.vmem [resolvable:$true] %s22
      %28 = dma.hbm_to_vmem [thread:$0]  %s3, 3072, %s23, [#allocation3], 64, 64, 4
    $region17: #{forward.1} parent=1 // pred_fallthru
      _
    // Predicated region
    $region18: #{forward.1} parent=1 // pred_check
      _
    $region19: #{forward.1} parent=1 // pred_check_branch
      %30 = sbr.rel (0) target = $region21
    $region20: #{forward.1} parent=1 // pred_region
      _
    $region21: #{forward.1} parent=1 // pred_fallthru
      _
    // Predicated region
    $region22: #{forward.1} parent=1 // pred_check
      _
    $region23: #{forward.1} parent=1 // pred_check_branch
      %32 = sbr.rel (0) target = $region25
    $region24: #{forward.1} parent=1 // pred_region
      %33 = dma.done [#allocation3], 3072
    $region25: #{forward.1} parent=1 // pred_fallthru
      _
    %v35 = vld [vmem:[%s0] sm:$0xf]
    %v36 = vld [vmem:[%s0 + $0x4] sm:$0xf]
    %v37 = vunpack.c.l.bf16 %v35
    %v38 = vunpack.c.l.bf16 %v36
    %vm41 = vcmask 1040384
    %v42 = vrot.slane %v37, 7
    %v43 = vrot.slane %v38, 7
    %v44 = vsel %vm41, %v42, %v43
    %v47 = vsel %vm41, 0.0, %v42
    %vm48 = vcmask 1046528
    %v49 = vrot.slane %v37, 1
    %v50 = vrot.slane %v38, 1
    %v51 = vsel %vm48, %v49, %v50
    %v54 = vsel %vm48, %v50, 0.0
    %v55 = vpack.c.bf16 %v44, %v47
    %v56 = vpack.c.bf16 %v38, %v37
    %v57 = vpack.c.bf16 %v54, %v51
    %v58 = vld [vmem:[#allocation2] sm:$0xf]
    %v59 = vld [vmem:[#allocation2 + $0x4] sm:$0xf]
    %v60 = vld [vmem:[#allocation2 + $0x8] sm:$0xf]
    %v61 = vld [vmem:[#allocation2 + $0xc] sm:$0xf]
    %v62 = vld [vmem:[#allocation2 + $0x10] sm:$0xf]
    %v63 = vld [vmem:[#allocation2 + $0x14] sm:$0xf]
    %v64 = vld [vmem:[#allocation2 + $0x18] sm:$0xf]
    %v65 = vld [vmem:[#allocation2 + $0x1c] sm:$0xf]
    %v66 = vld [vmem:[#allocation2 + $0x20] sm:$0xf]
    %v67 = vld [vmem:[#allocation2 + $0x24] sm:$0xf]
    %v68 = vld [vmem:[#allocation2 + $0x28] sm:$0xf]
    %v69 = vld [vmem:[#allocation2 + $0x2c] sm:$0xf]
    %v70 = vld [vmem:[#allocation2 + $0x30] sm:$0xf]
    %v71 = vld [vmem:[#allocation2 + $0x34] sm:$0xf]
    %v72 = vld [vmem:[#allocation2 + $0x38] sm:$0xf]
    %v73 = vld [vmem:[#allocation2 + $0x3c] sm:$0xf]
    %v74 = vld [vmem:[#allocation2 + $0x40] sm:$0xf]
    %v75 = vld [vmem:[#allocation2 + $0x44] sm:$0xf]
    %v76 = vld [vmem:[#allocation2 + $0x48] sm:$0xf]
    %v77 = vld [vmem:[#allocation2 + $0x4c] sm:$0xf]
    %v78 = vld [vmem:[#allocation2 + $0x50] sm:$0xf]
    %v79 = vld [vmem:[#allocation2 + $0x54] sm:$0xf]
    %v80 = vld [vmem:[#allocation2 + $0x58] sm:$0xf]
    %v81 = vld [vmem:[#allocation2 + $0x5c] sm:$0xf]
    %v82 = vld [vmem:[#allocation2 + $0x60] sm:$0xf]
    %v83 = vld [vmem:[#allocation2 + $0x64] sm:$0xf]
    %v84 = vld [vmem:[#allocation2 + $0x68] sm:$0xf]
    %v85 = vld [vmem:[#allocation2 + $0x6c] sm:$0xf]
    %v86 = vld [vmem:[#allocation2 + $0x70] sm:$0xf]
    %v87 = vld [vmem:[#allocation2 + $0x74] sm:$0xf]
    %v88 = vld [vmem:[#allocation2 + $0x78] sm:$0xf]
    %v89 = vld [vmem:[#allocation2 + $0x7c] sm:$0xf]
    %v90 = vld [vmem:[#allocation2 + $0x80] sm:$0xf]
    %v91 = vld [vmem:[#allocation2 + $0x84] sm:$0xf]
    %v92 = vld [vmem:[#allocation2 + $0x88] sm:$0xf]
    %v93 = vld [vmem:[#allocation2 + $0x8c] sm:$0xf]
    %v94 = vld [vmem:[#allocation2 + $0x90] sm:$0xf]
    %v95 = vld [vmem:[#allocation2 + $0x94] sm:$0xf]
    %v96 = vld [vmem:[#allocation2 + $0x98] sm:$0xf]
    %v97 = vld [vmem:[#allocation2 + $0x9c] sm:$0xf]
    %v98 = vld [vmem:[#allocation2 + $0xa0] sm:$0xf]
    %v99 = vld [vmem:[#allocation2 + $0xa4] sm:$0xf]
    %v100 = vld [vmem:[#allocation2 + $0xa8] sm:$0xf]
    %v101 = vld [vmem:[#allocation2 + $0xac] sm:$0xf]
    %v102 = vld [vmem:[#allocation2 + $0xb0] sm:$0xf]
    %v103 = vld [vmem:[#allocation2 + $0xb4] sm:$0xf]
    %v104 = vld [vmem:[#allocation2 + $0xb8] sm:$0xf]
    %v105 = vld [vmem:[#allocation2 + $0xbc] sm:$0xf]
    %v106 = vld [vmem:[%s1] sm:$0x1]
    %v108 = vlaneseq
    %v109 = vshrl.u32 %v108, 7
    %v110 = vsub.s32 0, %v109
    %v111 = vrot.slane %v106, %v110
    %v161 = vunpack.c.l.b16 %v58
    %v162 = vunpack.c.l.b16 %v59
    %v163 = vunpack.c.l.b16 %v60
    %v164 = vunpack.c.l.b16 %v61
    %v165 = vunpack.c.l.b16 %v62
    %v166 = vunpack.c.l.b16 %v63
    %v167 = vunpack.c.l.b16 %v64
    %v168 = vunpack.c.l.b16 %v65
    %v169 = vunpack.c.l.b16 %v66
    %v170 = vunpack.c.l.b16 %v67
    %v171 = vunpack.c.l.b16 %v68
    %v172 = vunpack.c.l.b16 %v69
    %v173 = vunpack.c.l.b16 %v70
    %v174 = vunpack.c.l.b16 %v71
    %v175 = vunpack.c.l.b16 %v72
    %v176 = vunpack.c.l.b16 %v73
    %v177 = vunpack.c.l.b16 %v74
    %v178 = vunpack.c.l.b16 %v75
    %v179 = vunpack.c.l.b16 %v76
    %v180 = vunpack.c.l.b16 %v77
    %v181 = vunpack.c.l.b16 %v78
    %v182 = vunpack.c.l.b16 %v79
    %v183 = vunpack.c.l.b16 %v80
    %v184 = vunpack.c.l.b16 %v81
    %v185 = vunpack.c.l.b16 %v82
    %v186 = vunpack.c.l.b16 %v83
    %v187 = vunpack.c.l.b16 %v84
    %v188 = vunpack.c.l.b16 %v85
    %v189 = vunpack.c.l.b16 %v86
    %v190 = vunpack.c.l.b16 %v87
    %v191 = vunpack.c.l.b16 %v88
    %v192 = vunpack.c.l.b16 %v89
    %v193 = vunpack.c.l.b16 %v90
    %v194 = vunpack.c.l.b16 %v91
    %v195 = vunpack.c.l.b16 %v92
    %v196 = vunpack.c.l.b16 %v93
    %v197 = vunpack.c.l.b16 %v94
    %v198 = vunpack.c.l.b16 %v95
    %v199 = vunpack.c.l.b16 %v96
    %v200 = vunpack.c.l.b16 %v97
    %v201 = vunpack.c.l.b16 %v98
    %v202 = vunpack.c.l.b16 %v99
    %v203 = vunpack.c.l.b16 %v100
    %v204 = vunpack.c.l.b16 %v101
    %v205 = vunpack.c.l.b16 %v102
    %v206 = vunpack.c.l.b16 %v103
    %v207 = vunpack.c.l.b16 %v104
    %v208 = vunpack.c.l.b16 %v105
    %v209 = vpack.c.b16 %v162, %v161
    %v210 = vpack.c.b16 %v164, %v163
    %v211 = vpack.c.b16 %v166, %v165
    %v212 = vpack.c.b16 %v168, %v167
    %v213 = vpack.c.b16 %v170, %v169
    %v214 = vpack.c.b16 %v172, %v171
    %v215 = vpack.c.b16 %v174, %v173
    %v216 = vpack.c.b16 %v176, %v175
    %v217 = vpack.c.b16 %v178, %v177
    %v218 = vpack.c.b16 %v180, %v179
    %v219 = vpack.c.b16 %v182, %v181
    %v220 = vpack.c.b16 %v184, %v183
    %v221 = vpack.c.b16 %v186, %v185
    %v222 = vpack.c.b16 %v188, %v187
    %v223 = vpack.c.b16 %v190, %v189
    %v224 = vpack.c.b16 %v192, %v191
    %v225 = vpack.c.b16 %v194, %v193
    %v226 = vpack.c.b16 %v196, %v195
    %v227 = vpack.c.b16 %v198, %v197
    %v228 = vpack.c.b16 %v200, %v199
    %v229 = vpack.c.b16 %v202, %v201
    %v230 = vpack.c.b16 %v204, %v203
    %v231 = vpack.c.b16 %v206, %v205
    %v232 = vpack.c.b16 %v208, %v207
    %257 = vmatprep.subr.bf16.mxu0 0
    %258 = vmatpush1.bf16.msra.mxu0 %v216
    %259 = vmatprep.subr.bf16.mxu0 0
    %260 = vmatpush1.bf16.msra.mxu0 %v215
    %261 = vmatprep.subr.bf16.mxu0 0
    %262 = vmatpush1.bf16.msra.mxu0 %v214
    %263 = vmatprep.subr.bf16.mxu0 0
    %264 = vmatpush1.bf16.msra.mxu0 %v213
    %265 = vmatprep.subr.bf16.mxu0 0
    %266 = vmatpush1.bf16.msra.mxu0 %v212
    %267 = vmatprep.subr.bf16.mxu0 0
    %268 = vmatpush1.bf16.msra.mxu0 %v211
    %269 = vmatprep.subr.bf16.mxu0 0
    %270 = vmatpush1.bf16.msra.mxu0 %v210
    %271 = vmatprep.subr.bf16.mxu0 0
    %272 = vmatpush1.bf16.msra.mxu0 %v209
    %273 = vmatprep.subr.bf16.mxu0 0
    %274 = vmatpush2.bf16.msra.mxu0 %v224
    %275 = vmatprep.subr.bf16.mxu0 0
    %276 = vmatpush2.bf16.msra.mxu0 %v223
    %277 = vmatprep.subr.bf16.mxu0 0
    %278 = vmatpush2.bf16.msra.mxu0 %v222
    %279 = vmatprep.subr.bf16.mxu0 0
    %280 = vmatpush2.bf16.msra.mxu0 %v221
    %281 = vmatprep.subr.bf16.mxu0 0
    %282 = vmatpush2.bf16.msra.mxu0 %v220
    %283 = vmatprep.subr.bf16.mxu0 0
    %284 = vmatpush2.bf16.msra.mxu0 %v219
    %285 = vmatprep.subr.bf16.mxu0 0
    %286 = vmatpush2.bf16.msra.mxu0 %v218
    %287 = vmatprep.subr.bf16.mxu0 0
    %288 = vmatpush2.bf16.msra.mxu0 %v217
    %289 = vmatprep.mubr.bf16.mxu0 %v56
    %290 = vmatmul.mubr.bf16.gmra.mxu0 %v55
    %v291 = vpop.f32.mrf.mxu0
    %v292 = vadd.f32 %v111, %v291
    %v293 = vpop.f32.mrf.mxu0
    %v294 = vpop.f32.mrf.mxu0
    %v295 = vadd.f32 %v111, %v294
    %v296 = vpop.f32.mrf.mxu0
    %297 = vdwg.mxu0
    %298 = vmatprep.subr.bf16.mxu0 0
    %299 = vmatpush1.bf16.msra.mxu0 %v232
    %300 = vmatprep.subr.bf16.mxu0 0
    %301 = vmatpush1.bf16.msra.mxu0 %v231
    %302 = vmatprep.subr.bf16.mxu0 0
    %303 = vmatpush1.bf16.msra.mxu0 %v230
    %304 = vmatprep.subr.bf16.mxu0 0
    %305 = vmatpush1.bf16.msra.mxu0 %v229
    %306 = vmatprep.subr.bf16.mxu0 0
    %307 = vmatpush1.bf16.msra.mxu0 %v228
    %308 = vmatprep.subr.bf16.mxu0 0
    %309 = vmatpush1.bf16.msra.mxu0 %v227
    %310 = vmatprep.subr.bf16.mxu0 0
    %311 = vmatpush1.bf16.msra.mxu0 %v226
    %312 = vmatprep.subr.bf16.mxu0 0
    %313 = vmatpush1.bf16.msra.mxu0 %v225
    %314 = vmatprep.subr.bf16.mxu0 0
    %315 = vmatpush2.bf16.msra.mxu0 0
    %316 = vmatprep.subr.bf16.mxu0 0
    %317 = vmatpush2.bf16.msra.mxu0 0
    %318 = vmatprep.subr.bf16.mxu0 0
    %319 = vmatpush2.bf16.msra.mxu0 0
    %320 = vmatprep.subr.bf16.mxu0 0
    %321 = vmatpush2.bf16.msra.mxu0 0
    %322 = vmatprep.subr.bf16.mxu0 0
    %323 = vmatpush2.bf16.msra.mxu0 0
    %324 = vmatprep.subr.bf16.mxu0 0
    %325 = vmatpush2.bf16.msra.mxu0 0
    %326 = vmatprep.subr.bf16.mxu0 0
    %327 = vmatpush2.bf16.msra.mxu0 0
    %328 = vmatprep.subr.bf16.mxu0 0
    %329 = vmatpush2.bf16.msra.mxu0 0
    %330 = vmatprep.mubr.bf16.mxu0 0
    %331 = vmatmul.mubr.bf16.gmra.mxu0 %v57
    %v332 = vpop.f32.mrf.mxu0
    %v333 = vadd.f32 %v292, %v332
    %v334 = vpop.f32.mrf.mxu0
    %v335 = vpop.f32.mrf.mxu0
    %v336 = vadd.f32 %v295, %v335
    %v337 = vpop.f32.mrf.mxu0
    %338 = vdwg.mxu0
    %v341 = vrot.slane %v333, 7
    %v342 = vrot.slane %v336, 7
    %v343 = vsel %vm41, %v341, %v342
    %v346 = vsel %vm41, 0.0, %v341
    %v347 = vrot.slane %v333, 1
    %v348 = vrot.slane %v336, 1
    %v349 = vsel %vm48, %v347, %v348
    %v352 = vsel %vm48, %v348, 0.0
    %v353 = vpack.c.bf16 %v343, %v346
    %v354 = vpack.c.bf16 %v336, %v333
    %v355 = vpack.c.bf16 %v352, %v349
    %v356 = vld [vmem:[%s4] sm:$0xff]
    %v357 = vld [vmem:[%s4 + $0x8] sm:$0xff]
    %v358 = vld [vmem:[%s4 + $0x10] sm:$0xff]
    %v359 = vld [vmem:[%s4 + $0x18] sm:$0xff]
    %v360 = vld [vmem:[%s4 + $0x20] sm:$0xff]
    %v361 = vld [vmem:[%s4 + $0x28] sm:$0xff]
    %v362 = vld [vmem:[%s4 + $0x30] sm:$0xff]
    %v363 = vld [vmem:[%s4 + $0x38] sm:$0xff]
    %v364 = vld [vmem:[%s4 + $0x40] sm:$0xff]
    %v365 = vld [vmem:[%s4 + $0x48] sm:$0xff]
    %v366 = vld [vmem:[%s4 + $0x50] sm:$0xff]
    %v367 = vld [vmem:[%s4 + $0x58] sm:$0xff]
    %v368 = vld [vmem:[%s4 + $0x60] sm:$0xff]
    %v369 = vld [vmem:[%s4 + $0x68] sm:$0xff]
    %v370 = vld [vmem:[%s4 + $0x70] sm:$0xff]
    %v371 = vld [vmem:[%s4 + $0x78] sm:$0xff]
    %v372 = vld [vmem:[%s4 + $0x80] sm:$0xff]
    %v373 = vld [vmem:[%s4 + $0x88] sm:$0xff]
    %v374 = vld [vmem:[%s4 + $0x90] sm:$0xff]
    %v375 = vld [vmem:[%s4 + $0x98] sm:$0xff]
    %v376 = vld [vmem:[%s4 + $0xa0] sm:$0xff]
    %v377 = vld [vmem:[%s4 + $0xa8] sm:$0xff]
    %v378 = vld [vmem:[%s4 + $0xb0] sm:$0xff]
    %v379 = vld [vmem:[%s4 + $0xb8] sm:$0xff]
    %v380 = vld [vmem:[%s4 + $0xc0] sm:$0xff]
    %v381 = vld [vmem:[%s4 + $0xc8] sm:$0xff]
    %v382 = vld [vmem:[%s4 + $0xd0] sm:$0xff]
    %v383 = vld [vmem:[%s4 + $0xd8] sm:$0xff]
    %v384 = vld [vmem:[%s4 + $0xe0] sm:$0xff]
    %v385 = vld [vmem:[%s4 + $0xe8] sm:$0xff]
    %v386 = vld [vmem:[%s4 + $0xf0] sm:$0xff]
    %v387 = vld [vmem:[%s4 + $0xf8] sm:$0xff]
    %v388 = vld [vmem:[%s4 + $0x100] sm:$0xff]
    %v389 = vld [vmem:[%s4 + $0x108] sm:$0xff]
    %v390 = vld [vmem:[%s4 + $0x110] sm:$0xff]
    %v391 = vld [vmem:[%s4 + $0x118] sm:$0xff]
    %v392 = vld [vmem:[%s4 + $0x120] sm:$0xff]
    %v393 = vld [vmem:[%s4 + $0x128] sm:$0xff]
    %v394 = vld [vmem:[%s4 + $0x130] sm:$0xff]
    %v395 = vld [vmem:[%s4 + $0x138] sm:$0xff]
    %v396 = vld [vmem:[%s4 + $0x140] sm:$0xff]
    %v397 = vld [vmem:[%s4 + $0x148] sm:$0xff]
    %v398 = vld [vmem:[%s4 + $0x150] sm:$0xff]
    %v399 = vld [vmem:[%s4 + $0x158] sm:$0xff]
    %v400 = vld [vmem:[%s4 + $0x160] sm:$0xff]
    %v401 = vld [vmem:[%s4 + $0x168] sm:$0xff]
    %v402 = vld [vmem:[%s4 + $0x170] sm:$0xff]
    %v403 = vld [vmem:[%s4 + $0x178] sm:$0xff]
    %v404 = vld [vmem:[%s2] sm:$0x3]
    %v406 = vlaneseq
    %v407 = vshrl.u32 %v406, 7
    %v408 = vsub.s32 0, %v407
    %v409 = vrot.slane %v404, %v408
    %v410 = vlaneseq
    %v411 = vshrl.u32 %v410, 7
    %v412 = vsub.s32 1, %v411
    %v413 = vrot.slane %v404, %v412
    %v464 = vunpack.c.l.b16 %v356
    %v465 = vunpack.c.h.b16 %v356
    %v466 = vunpack.c.l.b16 %v357
    %v467 = vunpack.c.h.b16 %v357
    %v468 = vunpack.c.l.b16 %v358
    %v469 = vunpack.c.h.b16 %v358
    %v470 = vunpack.c.l.b16 %v359
    %v471 = vunpack.c.h.b16 %v359
    %v472 = vunpack.c.l.b16 %v360
    %v473 = vunpack.c.h.b16 %v360
    %v474 = vunpack.c.l.b16 %v361
    %v475 = vunpack.c.h.b16 %v361
    %v476 = vunpack.c.l.b16 %v362
    %v477 = vunpack.c.h.b16 %v362
    %v478 = vunpack.c.l.b16 %v363
    %v479 = vunpack.c.h.b16 %v363
    %v480 = vunpack.c.l.b16 %v364
    %v481 = vunpack.c.h.b16 %v364
    %v482 = vunpack.c.l.b16 %v365
    %v483 = vunpack.c.h.b16 %v365
    %v484 = vunpack.c.l.b16 %v366
    %v485 = vunpack.c.h.b16 %v366
    %v486 = vunpack.c.l.b16 %v367
    %v487 = vunpack.c.h.b16 %v367
    %v488 = vunpack.c.l.b16 %v368
    %v489 = vunpack.c.h.b16 %v368
    %v490 = vunpack.c.l.b16 %v369
    %v491 = vunpack.c.h.b16 %v369
    %v492 = vunpack.c.l.b16 %v370
    %v493 = vunpack.c.h.b16 %v370
    %v494 = vunpack.c.l.b16 %v371
    %v495 = vunpack.c.h.b16 %v371
    %v496 = vunpack.c.l.b16 %v372
    %v497 = vunpack.c.h.b16 %v372
    %v498 = vunpack.c.l.b16 %v373
    %v499 = vunpack.c.h.b16 %v373
    %v500 = vunpack.c.l.b16 %v374
    %v501 = vunpack.c.h.b16 %v374
    %v502 = vunpack.c.l.b16 %v375
    %v503 = vunpack.c.h.b16 %v375
    %v504 = vunpack.c.l.b16 %v376
    %v505 = vunpack.c.h.b16 %v376
    %v506 = vunpack.c.l.b16 %v377
    %v507 = vunpack.c.h.b16 %v377
    %v508 = vunpack.c.l.b16 %v378
    %v509 = vunpack.c.h.b16 %v378
    %v510 = vunpack.c.l.b16 %v379
    %v511 = vunpack.c.h.b16 %v379
    %v512 = vunpack.c.l.b16 %v380
    %v513 = vunpack.c.h.b16 %v380
    %v514 = vunpack.c.l.b16 %v381
    %v515 = vunpack.c.h.b16 %v381
    %v516 = vunpack.c.l.b16 %v382
    %v517 = vunpack.c.h.b16 %v382
    %v518 = vunpack.c.l.b16 %v383
    %v519 = vunpack.c.h.b16 %v383
    %v520 = vunpack.c.l.b16 %v384
    %v521 = vunpack.c.h.b16 %v384
    %v522 = vunpack.c.l.b16 %v385
    %v523 = vunpack.c.h.b16 %v385
    %v524 = vunpack.c.l.b16 %v386
    %v525 = vunpack.c.h.b16 %v386
    %v526 = vunpack.c.l.b16 %v387
    %v527 = vunpack.c.h.b16 %v387
    %v528 = vunpack.c.l.b16 %v388
    %v529 = vunpack.c.h.b16 %v388
    %v530 = vunpack.c.l.b16 %v389
    %v531 = vunpack.c.h.b16 %v389
    %v532 = vunpack.c.l.b16 %v390
    %v533 = vunpack.c.h.b16 %v390
    %v534 = vunpack.c.l.b16 %v391
    %v535 = vunpack.c.h.b16 %v391
    %v536 = vunpack.c.l.b16 %v392
    %v537 = vunpack.c.h.b16 %v392
    %v538 = vunpack.c.l.b16 %v393
    %v539 = vunpack.c.h.b16 %v393
    %v540 = vunpack.c.l.b16 %v394
    %v541 = vunpack.c.h.b16 %v394
    %v542 = vunpack.c.l.b16 %v395
    %v543 = vunpack.c.h.b16 %v395
    %v544 = vunpack.c.l.b16 %v396
    %v545 = vunpack.c.h.b16 %v396
    %v546 = vunpack.c.l.b16 %v397
    %v547 = vunpack.c.h.b16 %v397
    %v548 = vunpack.c.l.b16 %v398
    %v549 = vunpack.c.h.b16 %v398
    %v550 = vunpack.c.l.b16 %v399
    %v551 = vunpack.c.h.b16 %v399
    %v552 = vunpack.c.l.b16 %v400
    %v553 = vunpack.c.h.b16 %v400
    %v554 = vunpack.c.l.b16 %v401
    %v555 = vunpack.c.h.b16 %v401
    %v556 = vunpack.c.l.b16 %v402
    %v557 = vunpack.c.h.b16 %v402
    %v558 = vunpack.c.l.b16 %v403
    %v559 = vunpack.c.h.b16 %v403
    %v560 = vpack.c.b16 %v466, %v464
    %v561 = vpack.c.b16 %v467, %v465
    %v562 = vpack.c.b16 %v470, %v468
    %v563 = vpack.c.b16 %v471, %v469
    %v564 = vpack.c.b16 %v474, %v472
    %v565 = vpack.c.b16 %v475, %v473
    %v566 = vpack.c.b16 %v478, %v476
    %v567 = vpack.c.b16 %v479, %v477
    %v568 = vpack.c.b16 %v482, %v480
    %v569 = vpack.c.b16 %v483, %v481
    %v570 = vpack.c.b16 %v486, %v484
    %v571 = vpack.c.b16 %v487, %v485
    %v572 = vpack.c.b16 %v490, %v488
    %v573 = vpack.c.b16 %v491, %v489
    %v574 = vpack.c.b16 %v494, %v492
    %v575 = vpack.c.b16 %v495, %v493
    %v576 = vpack.c.b16 %v498, %v496
    %v577 = vpack.c.b16 %v499, %v497
    %v578 = vpack.c.b16 %v502, %v500
    %v579 = vpack.c.b16 %v503, %v501
    %v580 = vpack.c.b16 %v506, %v504
    %v581 = vpack.c.b16 %v507, %v505
    %v582 = vpack.c.b16 %v510, %v508
    %v583 = vpack.c.b16 %v511, %v509
    %v584 = vpack.c.b16 %v514, %v512
    %v585 = vpack.c.b16 %v515, %v513
    %v586 = vpack.c.b16 %v518, %v516
    %v587 = vpack.c.b16 %v519, %v517
    %v588 = vpack.c.b16 %v522, %v520
    %v589 = vpack.c.b16 %v523, %v521
    %v590 = vpack.c.b16 %v526, %v524
    %v591 = vpack.c.b16 %v527, %v525
    %v592 = vpack.c.b16 %v530, %v528
    %v593 = vpack.c.b16 %v531, %v529
    %v594 = vpack.c.b16 %v534, %v532
    %v595 = vpack.c.b16 %v535, %v533
    %v596 = vpack.c.b16 %v538, %v536
    %v597 = vpack.c.b16 %v539, %v537
    %v598 = vpack.c.b16 %v542, %v540
    %v599 = vpack.c.b16 %v543, %v541
    %v600 = vpack.c.b16 %v546, %v544
    %v601 = vpack.c.b16 %v547, %v545
    %v602 = vpack.c.b16 %v550, %v548
    %v603 = vpack.c.b16 %v551, %v549
    %v604 = vpack.c.b16 %v554, %v552
    %v605 = vpack.c.b16 %v555, %v553
    %v606 = vpack.c.b16 %v558, %v556
    %v607 = vpack.c.b16 %v559, %v557
    %656 = vmatprep.subr.bf16.mxu0 %v575
    %657 = vmatpush1.bf16.msra.mxu0 %v574
    %658 = vmatprep.subr.bf16.mxu0 %v573
    %659 = vmatpush1.bf16.msra.mxu0 %v572
    %660 = vmatprep.subr.bf16.mxu0 %v571
    %661 = vmatpush1.bf16.msra.mxu0 %v570
    %662 = vmatprep.subr.bf16.mxu0 %v569
    %663 = vmatpush1.bf16.msra.mxu0 %v568
    %664 = vmatprep.subr.bf16.mxu0 %v567
    %665 = vmatpush1.bf16.msra.mxu0 %v566
    %666 = vmatprep.subr.bf16.mxu0 %v565
    %667 = vmatpush1.bf16.msra.mxu0 %v564
    %668 = vmatprep.subr.bf16.mxu0 %v563
    %669 = vmatpush1.bf16.msra.mxu0 %v562
    %670 = vmatprep.subr.bf16.mxu0 %v561
    %671 = vmatpush1.bf16.msra.mxu0 %v560
    %672 = vmatprep.subr.bf16.mxu0 %v591
    %673 = vmatpush2.bf16.msra.mxu0 %v590
    %674 = vmatprep.subr.bf16.mxu0 %v589
    %675 = vmatpush2.bf16.msra.mxu0 %v588
    %676 = vmatprep.subr.bf16.mxu0 %v587
    %677 = vmatpush2.bf16.msra.mxu0 %v586
    %678 = vmatprep.subr.bf16.mxu0 %v585
    %679 = vmatpush2.bf16.msra.mxu0 %v584
    %680 = vmatprep.subr.bf16.mxu0 %v583
    %681 = vmatpush2.bf16.msra.mxu0 %v582
    %682 = vmatprep.subr.bf16.mxu0 %v581
    %683 = vmatpush2.bf16.msra.mxu0 %v580
    %684 = vmatprep.subr.bf16.mxu0 %v579
    %685 = vmatpush2.bf16.msra.mxu0 %v578
    %686 = vmatprep.subr.bf16.mxu0 %v577
    %687 = vmatpush2.bf16.msra.mxu0 %v576
    %688 = vmatprep.mubr.bf16.mxu0 %v354
    %689 = vmatmul.mubr.bf16.gmra.mxu0 %v353
    %v690 = vpop.f32.mrf.mxu0
    %v691 = vadd.f32 %v409, %v690
    %v692 = vpop.f32.mrf.mxu0
    %v693 = vadd.f32 %v413, %v692
    %v694 = vpop.f32.mrf.mxu0
    %v695 = vadd.f32 %v409, %v694
    %v696 = vpop.f32.mrf.mxu0
    %v697 = vadd.f32 %v413, %v696
    %698 = vdwg.mxu0
    %699 = vmatprep.subr.bf16.mxu0 %v607
    %700 = vmatpush1.bf16.msra.mxu0 %v606
    %701 = vmatprep.subr.bf16.mxu0 %v605
    %702 = vmatpush1.bf16.msra.mxu0 %v604
    %703 = vmatprep.subr.bf16.mxu0 %v603
    %704 = vmatpush1.bf16.msra.mxu0 %v602
    %705 = vmatprep.subr.bf16.mxu0 %v601
    %706 = vmatpush1.bf16.msra.mxu0 %v600
    %707 = vmatprep.subr.bf16.mxu0 %v599
    %708 = vmatpush1.bf16.msra.mxu0 %v598
    %709 = vmatprep.subr.bf16.mxu0 %v597
    %710 = vmatpush1.bf16.msra.mxu0 %v596
    %711 = vmatprep.subr.bf16.mxu0 %v595
    %712 = vmatpush1.bf16.msra.mxu0 %v594
    %713 = vmatprep.subr.bf16.mxu0 %v593
    %714 = vmatpush1.bf16.msra.mxu0 %v592
    %715 = vmatprep.subr.bf16.mxu0 0
    %716 = vmatpush2.bf16.msra.mxu0 0
    %717 = vmatprep.subr.bf16.mxu0 0
    %718 = vmatpush2.bf16.msra.mxu0 0
    %719 = vmatprep.subr.bf16.mxu0 0
    %720 = vmatpush2.bf16.msra.mxu0 0
    %721 = vmatprep.subr.bf16.mxu0 0
    %722 = vmatpush2.bf16.msra.mxu0 0
    %723 = vmatprep.subr.bf16.mxu0 0
    %724 = vmatpush2.bf16.msra.mxu0 0
    %725 = vmatprep.subr.bf16.mxu0 0
    %726 = vmatpush2.bf16.msra.mxu0 0
    %727 = vmatprep.subr.bf16.mxu0 0
    %728 = vmatpush2.bf16.msra.mxu0 0
    %729 = vmatprep.subr.bf16.mxu0 0
    %730 = vmatpush2.bf16.msra.mxu0 0
    %731 = vmatprep.mubr.bf16.mxu0 0
    %732 = vmatmul.mubr.bf16.gmra.mxu0 %v355
    %v733 = vpop.f32.mrf.mxu0
    %v734 = vadd.f32 %v691, %v733
    %v735 = vpop.f32.mrf.mxu0
    %v736 = vadd.f32 %v693, %v735
    %v737 = vpop.f32.mrf.mxu0
    %v738 = vadd.f32 %v695, %v737
    %v739 = vpop.f32.mrf.mxu0
    %v740 = vadd.f32 %v697, %v739
    %741 = vdwg.mxu0
    %v742 = vmax.f32 %v734, 0.0
    %v743 = vmax.f32 %v736, 0.0
    %v744 = vmax.f32 %v738, 0.0
    %v745 = vmax.f32 %v740, 0.0
    %746 = vst [vmem:[%s5] sm:$0xff] %v742
    %747 = vst [vmem:[%s5 + $0x8] sm:$0xff] %v743
    %748 = vst [vmem:[%s5 + $0x10] sm:$0xff] %v744
    %749 = vst [vmem:[%s5 + $0x18] sm:$0xff] %v745
    // Predicated region
    $region26: #{forward.1} parent=1 // pred_check
      _
    $region27: #{forward.1} parent=1 // pred_check_branch
      %751 = sbr.rel (0) target = $region29
    $region28: #{forward.1} parent=1 // pred_region
      _
    $region29: #{forward.1} parent=1 // pred_fallthru
      _
    // Predicated region
    $region30: #{forward.1} parent=1 // pred_check
      _
    $region31: #{forward.1} parent=1 // pred_check_branch
      %753 = sbr.rel (0) target = $region33
    $region32: #{forward.1} parent=1 // pred_region
      _
    $region33: #{forward.1} parent=1 // pred_fallthru
      _
    %754 = vsyncpa [#allocation3], 1

</llo_original>
